<compile_context>
chip_gen: v7x
topology: tpu7x:2x2x1
jax: 0.10.0
libtpu: 0.0.40
codegen_flags: <defaults>
</compile_context>

<pallas_src>
import jax
import jax.numpy as jnp
from jax import lax
from jax.experimental import pallas as pl
from jax.experimental.pallas import tpu as pltpu


def _make_rope_kernel(rot_dim, rows_per_pack, lane_width, attention_scaling, out_dtype):
    scale = float(attention_scaling)          # trace-time constant (Python float in HF)
    apply_scale = scale != 1.0
    k = int(rows_per_pack)
    L = int(lane_width)

    def rope_kernel(pos_ref, inv_ref, cos_ref, sin_ref):
        # pos_ref: (TILE, k) float32 -- k consecutive (b,s) positions per packed row
        # inv_ref: (1, L)    float32 -- concat([inv_freq, inv_freq]) tiled k times along lanes
        pos = pos_ref[...]
        if k == 1:
            pos_e = pos                                            # (TILE, 1) lane-broadcasts
        else:
            T = pos.shape[0]
            lane = lax.broadcasted_iota(jnp.int32, (T, L), 1)
            pos_e = pos[:, 0:1]
            for j in range(1, k):                                  # static, tiny unrolled chain
                pos_e = jnp.where(lane >= j * rot_dim, pos[:, j:j + 1], pos_e)
        freqs = pos_e * inv_ref[...]                               # (TILE, L) exact f32 multiply
        cos = jnp.cos(freqs)
        sin = jnp.sin(freqs)
        if apply_scale:
            cos = cos * scale
            sin = sin * scale
        # Single full-width, lane-dense store per output.
        cos_ref[...] = cos.astype(out_dtype)
        sin_ref[...] = sin.astype(out_dtype)

    return rope_kernel


def gpt_neox_japanese_rotary_embedding(x, position_ids, inv_freq,
                                       attention_scaling=1.0, tile_rows=2048):
    """Pallas implementation of GPTNeoXJapaneseRotaryEmbedding.forward.

    x:            [B, S, hidden]  (only dtype is used, matching the PyTorch module)
    position_ids: [B, S]          integer positions
    inv_freq:     [half_dim]      float32 inverse frequencies
    returns (cos, sin), each [B, S, 2*half_dim] in x.dtype
    """
    B, S = position_ids.shape
    half_dim = inv_freq.shape[0]
    rot_dim = 2 * half_dim
    out_dtype = x.dtype
    out_itemsize = jnp.dtype(out_dtype).itemsize

    R = B * S

    # Lane packing: pack k consecutive rows per 128-lane row when possible.
    if rot_dim < 128 and 128 % rot_dim == 0 and R % (128 // rot_dim) == 0:
        k = 128 // rot_dim
    else:
        k = 1                                    # fallback: correct, just narrower lanes
    L = k * rot_dim
    RP = R // k                                  # packed row count; RP * L == R * rot_dim

    # Tile selection over packed rows.
    if RP <= 8:
        TILE = RP                                # single exact block (full-array-dim rule)
    else:
        target = max(8, (int(tile_rows) // 8) * 8)
        # ~ceil(RP/2) rounded up to a sublane group: keeps >= 2 tiles so the
        # "parallel" axis can shard across v7x's two TensorCores.
        half_rounded = ((RP + 15) // 16) * 8
        TILE = max(8, min(target, half_rounded))
    num_tiles = pl.cdiv(RP, TILE)                # last block may be partial; Pallas masks it

    # Positions: f32 (same precision loss >2^24 as the PyTorch module), packed (RP, k).
    pos_packed = position_ids.reshape(RP, k).astype(jnp.float32)

    # inv_freq duplicated (concat order, matching torch.cat((freqs, freqs), -1)),
    # then tiled k times to fill the 128-lane row.
    inv_f32 = inv_freq.astype(jnp.float32)
    inv_lane = jnp.tile(jnp.concatenate([inv_f32, inv_f32]), k).reshape(1, L)

    kernel = _make_rope_kernel(rot_dim, k, L, float(attention_scaling), out_dtype)

    cost = pl.CostEstimate(
        flops=2 * R * rot_dim,                                   # expand + scale
        transcendentals=2 * R * rot_dim,                         # cos + sin
        bytes_accessed=R * 4 + L * 4 + 2 * R * rot_dim * out_itemsize,
    )

    cos_flat, sin_flat = pl.pallas_call(
        kernel,
        out_shape=(
            jax.ShapeDtypeStruct((RP, L), out_dtype),
            jax.ShapeDtypeStruct((RP, L), out_dtype),
        ),
        grid_spec=pltpu.PrefetchScalarGridSpec(
            num_scalar_prefetch=0,
            grid=(num_tiles,),
            in_specs=[
                pl.BlockSpec((TILE, k), lambda r: (r, 0)),
                pl.BlockSpec((1, L), lambda r: (0, 0)),
            ],
            out_specs=[
                pl.BlockSpec((TILE, L), lambda r: (r, 0)),
                pl.BlockSpec((TILE, L), lambda r: (r, 0)),
            ],
        ),
        compiler_params=pltpu.CompilerParams(
            dimension_semantics=("parallel",),
        ),
        cost_estimate=cost,
    )(pos_packed, inv_lane)

    # (RP, L) -> (B, S, rot_dim) is a contiguous row-major reshape: free (no copy).
    cos = cos_flat.reshape(B, S, rot_dim)
    sin = sin_flat.reshape(B, S, rot_dim)
    return cos, sin


def _reference(x, position_ids, inv_freq, attention_scaling=1.0):
    # Pure-JAX reference mirroring the PyTorch forward (exact f32 outer product).
    pos = position_ids.astype(jnp.float32)[..., None]                 # (B, S, 1)
    inv = inv_freq.astype(jnp.float32)[None, None, :]                 # (1, 1, half)
    freqs = pos * inv                                                 # (B, S, half)
    emb = jnp.concatenate([freqs, freqs], axis=-1)                    # (B, S, rot_dim)
    cos = jnp.cos(emb) * attention_scaling
    sin = jnp.sin(emb) * attention_scaling
    return cos.astype(x.dtype), sin.astype(x.dtype)


if __name__ == "__main__":
    key = jax.random.PRNGKey(0)

    # --- Config 1: GPTNeoXJapanese-like small config (f32, exact-path check) ---
    B, S, hidden = 2, 8, 64
    num_heads = 2
    head_dim = hidden // num_heads            # 32
    rot_dim = head_dim                        # rotary_pct = 1.0
    half_dim = rot_dim // 2                   # 16
    rope_base = 10000.0
    attention_scaling = 1.0

    inv_freq = 1.0 / (rope_base ** (jnp.arange(0, rot_dim, 2, dtype=jnp.float32) / rot_dim))
    k1, k2, k3 = jax.random.split(key, 3)
    x = jax.random.normal(k1, (B, S, hidden), dtype=jnp.float32)
    position_ids = jnp.broadcast_to(jnp.arange(S, dtype=jnp.int32)[None, :], (B, S))

    cos, sin = gpt_neox_japanese_rotary_embedding(x, position_ids, inv_freq, attention_scaling)
    jax.block_until_ready((cos, sin))
    cos_ref, sin_ref = _reference(x, position_ids, inv_freq, attention_scaling)
    assert cos.shape == (B, S, rot_dim) and sin.shape == (B, S, rot_dim)
    assert cos.dtype == x.dtype and sin.dtype == x.dtype
    assert jnp.allclose(cos, cos_ref, atol=1e-6, rtol=1e-6)
    assert jnp.allclose(sin, sin_ref, atol=1e-6, rtol=1e-6)

    # --- Config 2: non-divisible grid (partial blocks), bf16 outputs, scaling ---
    B2, S2 = 3, 40
    att_scale2 = 0.83
    x2 = jax.random.normal(k2, (B2, S2, hidden), dtype=jnp.bfloat16)
    pos2 = jax.random.randint(k3, (B2, S2), 0, 500, dtype=jnp.int32)

    cos2, sin2 = gpt_neox_japanese_rotary_embedding(x2, pos2, inv_freq, att_scale2)
    jax.block_until_ready((cos2, sin2))
    cos2_ref, sin2_ref = _reference(x2, pos2, inv_freq, att_scale2)
    assert cos2.shape == (B2, S2, rot_dim) and cos2.dtype == jnp.bfloat16
    assert jnp.allclose(cos2.astype(jnp.float32), cos2_ref.astype(jnp.float32), atol=1e-2)
    assert jnp.allclose(sin2.astype(jnp.float32), sin2_ref.astype(jnp.float32), atol=1e-2)

    print("KERNEL_OK")
</pallas_src>

<mosaic_0001>
module attributes {stable_mosaic.version = 11 : i64} {
  func.func @rope_kernel(%arg0: i32, %arg1: memref<4x4xf32, #tpu.memory_space<vmem>>, %arg2: memref<1x128xf32, #tpu.memory_space<vmem>>, %arg3: memref<4x128xf32, #tpu.memory_space<vmem>>, %arg4: memref<4x128xf32, #tpu.memory_space<vmem>>) attributes {dimension_semantics = [#tpu.dimension_semantics<parallel>], iteration_bounds = array<i64: 1>, scalar_prefetch = 0 : i64, scratch_operands = 0 : i64, tpu.core_type = #tpu.core_type<tc>, window_params = [{transform_indices = @transform_0, window_bounds = array<i64: 4, 4>}, {pipeline_mode = #tpu.pipeline_mode<synchronous>, transform_indices = @transform_1, window_bounds = array<i64: 1, 128>}, {transform_indices = @transform_2, window_bounds = array<i64: 4, 128>}, {transform_indices = @transform_3, window_bounds = array<i64: 4, 128>}]} {
    %c0 = arith.constant 0 : index
    %c0_0 = arith.constant 0 : index
    %0 = vector.load %arg1[%c0, %c0_0] : memref<4x4xf32, #tpu.memory_space<vmem>>, vector<4x4xf32>
    %1 = tpu.iota {dimensions = array<i32: 1>} : vector<4x128xi32>
    %2 = vector.extract_strided_slice %0 {offsets = [0, 0], sizes = [4, 1], strides = [1, 1]} : vector<4x4xf32> to vector<4x1xf32>
    %c32_i32 = arith.constant 32 : i32
    %3 = vector.broadcast %c32_i32 : i32 to vector<4x128xi32>
    %4 = arith.cmpi sge, %1, %3 : vector<4x128xi32>
    %5 = vector.extract_strided_slice %0 {offsets = [0, 1], sizes = [4, 1], strides = [1, 1]} : vector<4x4xf32> to vector<4x1xf32>
    %6 = vector.shape_cast %5 : vector<4x1xf32> to vector<4x1xf32>
    %7 = vector.broadcast %6 : vector<4x1xf32> to vector<4x128xf32>
    %8 = vector.shape_cast %2 : vector<4x1xf32> to vector<4x1xf32>
    %9 = vector.broadcast %8 : vector<4x1xf32> to vector<4x128xf32>
    %10 = arith.select %4, %7, %9 : vector<4x128xi1>, vector<4x128xf32>
    %c64_i32 = arith.constant 64 : i32
    %11 = vector.broadcast %c64_i32 : i32 to vector<4x128xi32>
    %12 = arith.cmpi sge, %1, %11 : vector<4x128xi32>
    %13 = vector.extract_strided_slice %0 {offsets = [0, 2], sizes = [4, 1], strides = [1, 1]} : vector<4x4xf32> to vector<4x1xf32>
    %14 = vector.shape_cast %13 : vector<4x1xf32> to vector<4x1xf32>
    %15 = vector.broadcast %14 : vector<4x1xf32> to vector<4x128xf32>
    %16 = arith.select %12, %15, %10 : vector<4x128xi1>, vector<4x128xf32>
    %c96_i32 = arith.constant 96 : i32
    %17 = vector.broadcast %c96_i32 : i32 to vector<4x128xi32>
    %18 = arith.cmpi sge, %1, %17 : vector<4x128xi32>
    %19 = vector.extract_strided_slice %0 {offsets = [0, 3], sizes = [4, 1], strides = [1, 1]} : vector<4x4xf32> to vector<4x1xf32>
    %20 = vector.shape_cast %19 : vector<4x1xf32> to vector<4x1xf32>
    %21 = vector.broadcast %20 : vector<4x1xf32> to vector<4x128xf32>
    %22 = arith.select %18, %21, %16 : vector<4x128xi1>, vector<4x128xf32>
    %c0_1 = arith.constant 0 : index
    %c0_2 = arith.constant 0 : index
    %23 = vector.load %arg2[%c0_1, %c0_2] : memref<1x128xf32, #tpu.memory_space<vmem>>, vector<1x128xf32>
    %24 = vector.broadcast %23 : vector<1x128xf32> to vector<4x128xf32>
    %25 = arith.mulf %22, %24 : vector<4x128xf32>
    %26 = math.cos %25 : vector<4x128xf32>
    %27 = math.sin %25 : vector<4x128xf32>
    %c0_3 = arith.constant 0 : index
    %c0_4 = arith.constant 0 : index
    %28 = vector.load %arg3[%c0_3, %c0_4] : memref<4x128xf32, #tpu.memory_space<vmem>>, vector<4x128xf32>
    tpu.vector_store %arg3[%c0_3, %c0_4], %26 {strides = array<i32>} : memref<4x128xf32, #tpu.memory_space<vmem>>, vector<4x128xf32>,
    %c0_5 = arith.constant 0 : index
    %c0_6 = arith.constant 0 : index
    %29 = vector.load %arg4[%c0_5, %c0_6] : memref<4x128xf32, #tpu.memory_space<vmem>>, vector<4x128xf32>
    tpu.vector_store %arg4[%c0_5, %c0_6], %27 {strides = array<i32>} : memref<4x128xf32, #tpu.memory_space<vmem>>, vector<4x128xf32>,
    return
  }
  func.func @transform_0(%arg0: i32) -> (i32, i32) {
    %c0_i32 = arith.constant 0 : i32
    %c0_i32_0 = arith.constant 0 : i32
    return %arg0, %c0_i32 : i32, i32
  }
  func.func @transform_1(%arg0: i32) -> (i32, i32) {
    %c0_i32 = arith.constant 0 : i32
    %c0_i32_0 = arith.constant 0 : i32
    %c0_i32_1 = arith.constant 0 : i32
    return %c0_i32, %c0_i32_0 : i32, i32
  }
  func.func @transform_2(%arg0: i32) -> (i32, i32) {
    %c0_i32 = arith.constant 0 : i32
    %c0_i32_0 = arith.constant 0 : i32
    return %arg0, %c0_i32 : i32, i32
  }
  func.func @transform_3(%arg0: i32) -> (i32, i32) {
    %c0_i32 = arith.constant 0 : i32
    %c0_i32_0 = arith.constant 0 : i32
    return %arg0, %c0_i32 : i32, i32
  }
}

</mosaic_0001>

<llo_original>
// kernel: tpu_custom_call.1
$region0: #{tpu_custom_call.1}
  #allocation0 [shape = 'u32[]', space=smem, size = 0x4, offset = 0x4, fixed_abs, tag = 'smem constant byte address 0x4 - core index']
  #allocation1 [shape = 'u32[144,128]{1,0:T(1,128)}', space=vmem, size = 0x12000, scoped, tag = 'internal scratch']
  %s0 = inlined_call_operand.hbm [shape: f32[4,4], index: 0, kind: input, shape index: {}]
  %s1 = inlined_call_operand.vmem [shape: f32[1,128], index: 1, kind: input, shape index: {}]
  %s2 = inlined_call_operand.hbm [shape: f32[4,128], index: 2, kind: output, shape index: {0}]
  %s3 = inlined_call_operand.hbm [shape: f32[4,128], index: 3, kind: output, shape index: {1}]
  %4 = xla_tuple %s2, %s3
  %s5 = sld [smem:[#allocation0]]
  $region30: #{tpu_custom_call.1} parent=0
    _
  %s7 = ssub.s32 1, %s5
  %s8 = scalar_select 0, %s7, %s5
  $region1: #{tpu_custom_call.1} parent=0
    #allocation2 [shape = 'u8[2048]{0}', space=vmem, size = 0x800, scoped, tag = 'input window, operand 0, single buffered']
    #allocation3 [shape = 's32[1]{0}', space=sflag, size = 0x4, scoped, tag = 'scoped memory for tpu_custom_call.1']
    #allocation4 [shape = 's32[1]{0}', space=sflag, size = 0x4, scoped, tag = 'scoped memory for tpu_custom_call.1']
    #allocation5 [shape = 'u8[2048]{0}', space=vmem, size = 0x800, scoped, tag = 'output window, operand 0, single buffered']
    #allocation6 [shape = 'u8[2048]{0}', space=vmem, size = 0x800, scoped, tag = 'output window, operand 1, single buffered']
    #allocation7 [shape = 's32[1]{0}', space=sflag, size = 0x4, scoped, tag = 'scoped memory for tpu_custom_call.1']
    %9 = vsyncpa [#allocation3], 0
    %10 = vsyncpa [#allocation4], 0
    %11 = vsyncpa [#allocation7], 0
    // Predicated region
    $region2: #{tpu_custom_call.1} parent=1 // pred_check
      _
    $region3: #{tpu_custom_call.1} parent=1 // pred_check_branch
      %13 = sbr.rel (0) target = $region5
    $region4: #{tpu_custom_call.1} parent=1 // pred_region
      %s15 = ssub.s32 64, 64
      %16 = vsyncadd [#allocation3], %s15
      %s18 = sshll.u32 [#allocation2], 4
      %s19 = int_to_ptr.vmem [resolvable:$true] %s18
      %21 = dma.hbm_to_vmem [thread:$0]  %s0, 64, %s19, [#allocation3]
    $region5: #{tpu_custom_call.1} parent=1 // pred_fallthru
      _
    // Predicated region
    $region6: #{tpu_custom_call.1} parent=1 // pred_check
      _
    $region7: #{tpu_custom_call.1} parent=1 // pred_check_branch
      %23 = sbr.rel (0) target = $region9
    $region8: #{tpu_custom_call.1} parent=1 // pred_region
      _
    $region9: #{tpu_custom_call.1} parent=1 // pred_fallthru
      _
    // Predicated region
    $region10: #{tpu_custom_call.1} parent=1 // pred_check
      _
    $region11: #{tpu_custom_call.1} parent=1 // pred_check_branch
      %25 = sbr.rel (0) target = $region13
    $region12: #{tpu_custom_call.1} parent=1 // pred_region
      %26 = dma.done [#allocation3], 64
    $region13: #{tpu_custom_call.1} parent=1 // pred_fallthru
      _
    %v27 = vld [vmem:[#allocation2] sm:$0xf]
    %v28 = vlaneseq
    %v29 = vand.u32 %v28, 127
    %vm30 = vcmp.ge.s32.totalorder %v29, 32
    %32 = vset.pattern.permute.xlu0 1
    %33 = vperm.xlu0 %32, %v27
    %v34 = vpop.permute.xlu0 %33
    %36 = vset.pattern.permute.xlu0 0
    %37 = vperm.xlu0 %36, %v27
    %v38 = vpop.permute.xlu0 %37
    %v40 = vsel %vm30, %v34, %v38
    %vm41 = vcmp.ge.s32.totalorder %v29, 64
    %42 = vset.pattern.permute.xlu0 2
    %43 = vperm.xlu0 %42, %v27
    %v44 = vpop.permute.xlu0 %43
    %v46 = vsel %vm41, %v44, %v40
    %vm47 = vcmp.ge.s32.totalorder %v29, 96
    %48 = vset.pattern.permute.xlu0 3
    %49 = vperm.xlu0 %48, %v27
    %v50 = vpop.permute.xlu0 %49
    %v52 = vsel %vm47, %v50, %v46
    %v53 = vld [vmem:[%s1] sm:$0x1]
    %v55 = vlaneseq
    %v56 = vshrl.u32 %v55, 7
    %v57 = vsub.s32 0, %v56
    %v58 = vrot.slane %v53, %v57
    %v60 = vmul.f32 %v52, %v58
    %v61 = vand.u32 2147483647, %v60
    %vm62 = vcmp.le.f32.partialorder %v61, 0.7853982
    %vm63 = vcmp.lt.s32.totalorder %v60, 0
    %v64 = vand.u32 %v60, 2139095040
    %v65 = vshrl.u32 %v64, 23
    %v66 = vsub.s32 %v65, 127
    %v67 = vand.u32 2147483647, %v60
    %v68 = vand.u32 %v67, 8388607
    %v69 = vor.u32 %v68, 8388608
    %v70 = vsub.s32 0, %v69
    %v71 = vadd.s32 %v66, 1
    %vm72 = vcmp.gt.s32.totalorder %v71, 0
    %v73 = vsel %vm72, %v71, 0
    %v74 = vshrl.u32 %v73, 5
    %v75 = vand.u32 %v73, 31
    %v76 = vsub.s32 32, %v75
    %v77 = vshrl.u32 683565275, %v76
    %v78 = vshll.u32 683565275, %v75
    %v79 = vshrl.u32 2475754826, %v76
    %v80 = vor.u32 %v78, %v79
    %v81 = vshll.u32 2475754826, %v75
    %v82 = vshrl.u32 2131351028, %v76
    %v83 = vor.u32 %v81, %v82
    %v84 = vshll.u32 2131351028, %v75
    %v85 = vshrl.u32 2102212464, %v76
    %v86 = vor.u32 %v84, %v85
    %v87 = vshll.u32 2102212464, %v75
    %v88 = vshrl.u32 920167782, %v76
    %v89 = vor.u32 %v87, %v88
    %v90 = vshll.u32 920167782, %v75
    %v91 = vshrl.u32 1326507024, %v76
    %v92 = vor.u32 %v90, %v91
    %vm93 = vcmp.lt.s32.totalorder %v74, 1
    %vm94 = vcmp.lt.s32.totalorder %v74, 2
    %vm95 = vcmp.lt.s32.totalorder %v74, 3
    %vm96 = vcmp.lt.s32.totalorder %v74, 4
    %v97 = vsel %vm93, %v77, %v80
    %v98 = vsel %vm96, %v86, 2102212464
    %v99 = vsel %vm95, %v83, %v98
    %v100 = vsel %vm94, %v97, %v99
    %v101 = vsel %vm93, %v80, %v83
    %v102 = vsel %vm96, %v89, 920167782
    %v103 = vsel %vm95, %v86, %v102
    %v104 = vsel %vm94, %v101, %v103
    %v105 = vsel %vm93, %v83, %v86
    %v106 = vsel %vm96, %v92, 1326507024
    %v107 = vsel %vm95, %v89, %v106
    %v108 = vsel %vm94, %v105, %v107
    %v109 = vshll.u32 %v69, 8
    %v110 = vmul.u32.u64.compose %v109, %v108
    %v111 = vextract.low.u32 %v110
    %v112 = vextract.high.u32 %v110
    %v113 = vmul.u32.u64.compose %v109, %v104
    %v114 = vextract.low.u32 %v113
    %v115 = vextract.high.u32 %v113
    %v116 = vmul.u32 %v109, %v100
    %v117 = vadd.s32 %v112, %v114
    %vm118 = vc.u32 %v112, %v114
    %v119 = vadd.s32 %v115, 1
    %v120 = vsel %vm118, %v119, %v115
    %v121 = vadd.s32 %v116, %v120
    %v122 = vadd.s32 %v121, 536870912
    %v123 = vshrl.u32 %v122, 30
    %v124 = vshll.u32 %v123, 30
    %v125 = vsub.s32 %v121, %v124
    %vm126 = vcmp.lt.s32.totalorder %v125, 0
    %v127 = vsub.s32 0, %v125
    %v128 = vsel %vm126, %v127, %v125
    %v129 = vclz %v128
    %v130 = vsub.s32 %v129, 2
    %vm131 = vcmp.gt.s32.totalorder 0, %v130
    %v132 = vsel %vm131, 0, %v130
    %v133 = vsub.s32 32, %v132
    %v134 = vshll.u32 %v125, %v132
    %v135 = vshrl.u32 %v117, %v133
    %v136 = vor.u32 %v134, %v135
    %v137 = vsub.s32 4294967266, %v132
    %v138 = vadd.s32 %v137, 127
    %v139 = vshll.u32 %v138, 23
    %v140 = vor.u32 4788187, %v139
    %v141 = vand.u32 2147483647, %v140
    %v143 = vcvt.s32.f32 %v136
    %v144 = vmul.f32 %v143, %v141
    %v145 = vxor.u32 %v144, 2147483648
    %v146 = vsel %vm63, %v145, %v144
    %v147 = vsub.s32 4, %v123
    %v148 = vsel %vm63, %v147, %v123
    %v149 = vsel %vm62, %v60, %v146
    %v150 = vsel %vm62, 0, %v148
    %v151 = vcosq.f32.pop %v149
    %v152 = vsinq.f32.pop %v149
    %vm153 = vweird.f32 %v60
    %v154 = vand.u32 %v150, 3
    %vm155 = vcmp.lt.s32.totalorder %v154, 2
    %vm156 = vcmp.eq.s32.totalorder %v154, 0
    %v157 = vxor.u32 %v152, 2147483648
    %v158 = vsel %vm156, %v151, %v157
    %vm159 = vcmp.eq.s32.totalorder %v154, 2
    %v160 = vxor.u32 %v151, 2147483648
    %v161 = vsel %vm159, %v160, %v152
    %v162 = vsel %vm155, %v158, %v161
    %v163 = vsel %vm153, nan, %v162
    %v164 = vand.u32 2147483647, %v60
    %vm165 = vcmp.le.f32.partialorder %v164, 0.7853982
    %vm166 = vcmp.lt.s32.totalorder %v60, 0
    %v167 = vand.u32 %v60, 2139095040
    %v168 = vshrl.u32 %v167, 23
    %v169 = vsub.s32 %v168, 127
    %v170 = vand.u32 2147483647, %v60
    %v171 = vand.u32 %v170, 8388607
    %v172 = vor.u32 %v171, 8388608
    %v173 = vsub.s32 0, %v172
    %v174 = vadd.s32 %v169, 1
    %vm175 = vcmp.gt.s32.totalorder %v174, 0
    %v176 = vsel %vm175, %v174, 0
    %v177 = vshrl.u32 %v176, 5
    %v178 = vand.u32 %v176, 31
    %v179 = vsub.s32 32, %v178
    %v180 = vshrl.u32 683565275, %v179
    %v181 = vshll.u32 683565275, %v178
    %v182 = vshrl.u32 2475754826, %v179
    %v183 = vor.u32 %v181, %v182
    %v184 = vshll.u32 2475754826, %v178
    %v185 = vshrl.u32 2131351028, %v179
    %v186 = vor.u32 %v184, %v185
    %v187 = vshll.u32 2131351028, %v178
    %v188 = vshrl.u32 2102212464, %v179
    %v189 = vor.u32 %v187, %v188
    %v190 = vshll.u32 2102212464, %v178
    %v191 = vshrl.u32 920167782, %v179
    %v192 = vor.u32 %v190, %v191
    %v193 = vshll.u32 920167782, %v178
    %v194 = vshrl.u32 1326507024, %v179
    %v195 = vor.u32 %v193, %v194
    %vm196 = vcmp.lt.s32.totalorder %v177, 1
    %vm197 = vcmp.lt.s32.totalorder %v177, 2
    %vm198 = vcmp.lt.s32.totalorder %v177, 3
    %vm199 = vcmp.lt.s32.totalorder %v177, 4
    %v200 = vsel %vm196, %v180, %v183
    %v201 = vsel %vm199, %v189, 2102212464
    %v202 = vsel %vm198, %v186, %v201
    %v203 = vsel %vm197, %v200, %v202
    %v204 = vsel %vm196, %v183, %v186
    %v205 = vsel %vm199, %v192, 920167782
    %v206 = vsel %vm198, %v189, %v205
    %v207 = vsel %vm197, %v204, %v206
    %v208 = vsel %vm196, %v186, %v189
    %v209 = vsel %vm199, %v195, 1326507024
    %v210 = vsel %vm198, %v192, %v209
    %v211 = vsel %vm197, %v208, %v210
    %v212 = vshll.u32 %v172, 8
    %v213 = vmul.u32.u64.compose %v212, %v211
    %v214 = vextract.low.u32 %v213
    %v215 = vextract.high.u32 %v213
    %v216 = vmul.u32.u64.compose %v212, %v207
    %v217 = vextract.low.u32 %v216
    %v218 = vextract.high.u32 %v216
    %v219 = vmul.u32 %v212, %v203
    %v220 = vadd.s32 %v215, %v217
    %vm221 = vc.u32 %v215, %v217
    %v222 = vadd.s32 %v218, 1
    %v223 = vsel %vm221, %v222, %v218
    %v224 = vadd.s32 %v219, %v223
    %v225 = vadd.s32 %v224, 536870912
    %v226 = vshrl.u32 %v225, 30
    %v227 = vshll.u32 %v226, 30
    %v228 = vsub.s32 %v224, %v227
    %vm229 = vcmp.lt.s32.totalorder %v228, 0
    %v230 = vsub.s32 0, %v228
    %v231 = vsel %vm229, %v230, %v228
    %v232 = vclz %v231
    %v233 = vsub.s32 %v232, 2
    %vm234 = vcmp.gt.s32.totalorder 0, %v233
    %v235 = vsel %vm234, 0, %v233
    %v236 = vsub.s32 32, %v235
    %v237 = vshll.u32 %v228, %v235
    %v238 = vshrl.u32 %v220, %v236
    %v239 = vor.u32 %v237, %v238
    %v240 = vsub.s32 4294967266, %v235
    %v241 = vadd.s32 %v240, 127
    %v242 = vshll.u32 %v241, 23
    %v243 = vor.u32 4788187, %v242
    %v244 = vand.u32 2147483647, %v243
    %v246 = vcvt.s32.f32 %v239
    %v247 = vmul.f32 %v246, %v244
    %v248 = vxor.u32 %v247, 2147483648
    %v249 = vsel %vm166, %v248, %v247
    %v250 = vsub.s32 4, %v226
    %v251 = vsel %vm166, %v250, %v226
    %v252 = vsel %vm165, %v60, %v249
    %v253 = vsel %vm165, 0, %v251
    %v254 = vcosq.f32.pop %v252
    %v255 = vsinq.f32.pop %v252
    %vm256 = vweird.f32 %v60
    %v257 = vadd.s32 %v253, 3
    %v258 = vand.u32 %v257, 3
    %vm259 = vcmp.lt.s32.totalorder %v258, 2
    %vm260 = vcmp.eq.s32.totalorder %v258, 0
    %v261 = vxor.u32 %v255, 2147483648
    %v262 = vsel %vm260, %v254, %v261
    %vm263 = vcmp.eq.s32.totalorder %v258, 2
    %v264 = vxor.u32 %v254, 2147483648
    %v265 = vsel %vm263, %v264, %v255
    %v266 = vsel %vm259, %v262, %v265
    %v267 = vsel %vm256, nan, %v266
    %268 = vst [vmem:[#allocation5] sm:$0xf] %v163
    %269 = vst [vmem:[#allocation6] sm:$0xf] %v267
    // Predicated region
    $region14: #{tpu_custom_call.1} parent=1 // pred_check
      _
    $region15: #{tpu_custom_call.1} parent=1 // pred_check_branch
      %271 = sbr.rel (0) target = $region17
    $region16: #{tpu_custom_call.1} parent=1 // pred_region
      %s273 = ssub.s32 64, 64
      %274 = vsyncadd [#allocation4], %s273
      %s276 = sshll.u32 [#allocation5], 4
      %s277 = int_to_ptr.vmem [resolvable:$true] %s276
      %279 = dma.vmem_to_hbm [thread:$0]  %s277, 64, %s2, [#allocation4]
    $region17: #{tpu_custom_call.1} parent=1 // pred_fallthru
      _
    // Predicated region
    $region18: #{tpu_custom_call.1} parent=1 // pred_check
      _
    $region19: #{tpu_custom_call.1} parent=1 // pred_check_branch
      %281 = sbr.rel (0) target = $region21
    $region20: #{tpu_custom_call.1} parent=1 // pred_region
      %s283 = ssub.s32 64, 64
      %284 = vsyncadd [#allocation7], %s283
      %s286 = sshll.u32 [#allocation6], 4
      %s287 = int_to_ptr.vmem [resolvable:$true] %s286
      %289 = dma.vmem_to_hbm [thread:$0]  %s287, 64, %s3, [#allocation7]
    $region21: #{tpu_custom_call.1} parent=1 // pred_fallthru
      _
    // Predicated region
    $region22: #{tpu_custom_call.1} parent=1 // pred_check
      _
    $region23: #{tpu_custom_call.1} parent=1 // pred_check_branch
      %291 = sbr.rel (0) target = $region25
    $region24: #{tpu_custom_call.1} parent=1 // pred_region
      %292 = dma.done [#allocation4], 64
    $region25: #{tpu_custom_call.1} parent=1 // pred_fallthru
      _
    // Predicated region
    $region26: #{tpu_custom_call.1} parent=1 // pred_check
      _
    $region27: #{tpu_custom_call.1} parent=1 // pred_check_branch
      %294 = sbr.rel (0) target = $region29
    $region28: #{tpu_custom_call.1} parent=1 // pred_region
      %295 = dma.done [#allocation7], 64
    $region29: #{tpu_custom_call.1} parent=1 // pred_fallthru
      _
    %296 = vsyncpa [#allocation3], 1
    %297 = vsyncpa [#allocation4], 1
    %298 = vsyncpa [#allocation7], 1

</llo_original>
